<compile_context>
chip_gen: v7x
topology: tpu7x:2x2x1
jax: 0.10.0
libtpu: 0.0.40
codegen_flags: <defaults>
</compile_context>

<pallas_src>
import numpy as np
import jax
import jax.numpy as jnp
from jax.experimental import pallas as pl
from jax.experimental.pallas import tpu as pltpu


def _reweighting_kernel(c_ref, fpw_ref, o_ref):
    """Fused Fourier-features + (pre-normalized) Linear(C -> 1).

    c_ref:   (TB, 1)  noise levels (batch tile)
    fpw_ref: (3,  C)  row 0: 2*pi*freq, row 1: 2*pi*phase, row 2: w_hat
    o_ref:   (TB, 1)  output tile
    """
    c = c_ref[...]                     # (TB, 1) f32
    f = fpw_ref[0:1, :]                # (1, C)  2*pi*freq
    p = fpw_ref[1:2, :]                # (1, C)  2*pi*phase
    w = fpw_ref[2:3, :]                # (1, C)  pre-normalized weight

    emb = jnp.cos(c * f + p)           # (TB, C)  VPU mul/add + EUP cos
    # Linear with C_out = 1: elementwise multiply + cross-lane sum (XLU), no MXU.
    o_ref[...] = jnp.sum(emb * w, axis=1, keepdims=True).astype(o_ref.dtype)


def prepare_reweighting_params(freq, phase, weight, *, eps=1e-4):
    """Init-time (call ONCE): fold 2*pi and the weight renorm, pack into (3, C).

    Matches the eval-time PyTorch math:
      w_hat = W / (eps + sqrt(1/fan_in) * ||W||) / sqrt(fan_in)
    (valid because C_out == 1, so the per-row norm equals the full-tensor norm).
    """
    C = freq.shape[0]
    w = weight.astype(jnp.float32).reshape(1, C)
    fan_in = w.shape[1]

    two_pi = np.float32(2.0 * np.pi)
    f2 = (freq.astype(jnp.float32) * two_pi).reshape(1, C)
    p2 = (phase.astype(jnp.float32) * two_pi).reshape(1, C)

    n = jnp.sqrt(jnp.sum(w * w, axis=1, keepdims=True))                  # (1, 1)
    alpha = np.float32(np.sqrt(1.0 / fan_in, dtype=np.float32))
    inv_sqrt_fan_in = np.float32(1.0 / np.sqrt(fan_in, dtype=np.float32))
    w_hat = w * (inv_sqrt_fan_in / (np.float32(eps) + alpha * n))        # (1, C)

    return jnp.concatenate([f2, p2, w_hat], axis=0)                      # (3, C)


def reweighting(c_noise, fpw, *, block_b=2048):
    """Reweighting.forward (eval).  c_noise: (B,), fpw: (3, C) from prepare_*."""
    B = c_noise.shape[0]
    C = fpw.shape[1]

    # Batch tile: full batch if it fits, otherwise tile (and pad B to a multiple
    # of the tile so every grid block is full — padded rows are discarded).
    TB = min(block_b, B)
    Bp = ((B + TB - 1) // TB) * TB

    c2 = c_noise.astype(jnp.float32).reshape(B, 1)
    if Bp != B:
        c2 = jnp.pad(c2, ((0, Bp - B), (0, 0)))

    out = pl.pallas_call(
        _reweighting_kernel,
        out_shape=jax.ShapeDtypeStruct((Bp, 1), jnp.float32),
        grid_spec=pltpu.PrefetchScalarGridSpec(
            num_scalar_prefetch=0,
            grid=(Bp // TB,),
            in_specs=[
                pl.BlockSpec((TB, 1), lambda i: (i, 0)),   # per-tile noise levels
                pl.BlockSpec((3, C), lambda i: (0, 0)),    # constants: resident
            ],
            out_specs=pl.BlockSpec((TB, 1), lambda i: (i, 0)),
        ),
        compiler_params=pltpu.CompilerParams(
            dimension_semantics=("parallel",)),
        cost_estimate=pl.CostEstimate(
            flops=3 * Bp * C,
            transcendentals=Bp * C,
            bytes_accessed=4 * (Bp + 3 * C + Bp)),
    )(c2, fpw)

    return out[:B] if Bp != B else out


if __name__ == "__main__":
    key = jax.random.PRNGKey(0)
    B, C = 8, 256                      # n_channels=256 matches the module default
    k1, k2, k3, k4 = jax.random.split(key, 4)

    c_noise = jax.random.normal(k1, (B,), jnp.float32)
    freq = jax.random.normal(k2, (C,), jnp.float32)          # Fourier.frequencies ~ randn
    phase = jax.random.uniform(k3, (C,), jnp.float32)        # Fourier.phases ~ rand
    weight = jax.random.normal(k4, (1, C), jnp.float32)      # Linear(C, 1).weight ~ randn

    # Init-time parameter prep (one-off), then the per-call fused kernel.
    fpw = jax.block_until_ready(prepare_reweighting_params(freq, phase, weight))
    fwd = jax.jit(reweighting)
    out = jax.block_until_ready(fwd(c_noise, fpw))
    assert out.shape == (B, 1)

    # Pure-JAX reference matching the original PyTorch eval-time math.
    emb_ref = jnp.cos(2.0 * np.pi * (c_noise[:, None] * freq[None, :] + phase[None, :]))
    n_ref = jnp.sqrt(jnp.sum(weight * weight))
    alpha_ref = np.sqrt(1.0 / C, dtype=np.float32)
    w_ref = weight / (1e-4 + alpha_ref * n_ref) / np.sqrt(C, dtype=np.float32)
    out_ref = emb_ref @ w_ref.T
    assert jnp.allclose(out, out_ref, atol=1e-5, rtol=1e-5), "mismatch vs JAX reference"

    print("KERNEL_OK")
</pallas_src>

<mosaic_0001>
module attributes {stable_mosaic.version = 11 : i64} {
  func.func @_reweighting_kernel(%arg0: i32, %arg1: memref<8x1xf32, #tpu.memory_space<vmem>>, %arg2: memref<3x256xf32, #tpu.memory_space<vmem>>, %arg3: memref<8x1xf32, #tpu.memory_space<vmem>>) attributes {dimension_semantics = [#tpu.dimension_semantics<parallel>], iteration_bounds = array<i64: 1>, scalar_prefetch = 0 : i64, scratch_operands = 0 : i64, tpu.core_type = #tpu.core_type<tc>, window_params = [{transform_indices = @transform_0, window_bounds = array<i64: 8, 1>}, {pipeline_mode = #tpu.pipeline_mode<synchronous>, transform_indices = @transform_1, window_bounds = array<i64: 3, 256>}, {transform_indices = @transform_2, window_bounds = array<i64: 8, 1>}]} {
    %c0 = arith.constant 0 : index
    %c0_0 = arith.constant 0 : index
    %0 = vector.load %arg1[%c0, %c0_0] : memref<8x1xf32, #tpu.memory_space<vmem>>, vector<8x1xf32>
    %c0_1 = arith.constant 0 : index
    %c0_2 = arith.constant 0 : index
    %1 = vector.load %arg2[%c0_1, %c0_2] : memref<3x256xf32, #tpu.memory_space<vmem>>, vector<1x256xf32>
    %c1 = arith.constant 1 : index
    %c0_3 = arith.constant 0 : index
    %2 = vector.load %arg2[%c1, %c0_3] : memref<3x256xf32, #tpu.memory_space<vmem>>, vector<1x256xf32>
    %c2 = arith.constant 2 : index
    %c0_4 = arith.constant 0 : index
    %3 = vector.load %arg2[%c2, %c0_4] : memref<3x256xf32, #tpu.memory_space<vmem>>, vector<1x256xf32>
    %4 = vector.broadcast %0 : vector<8x1xf32> to vector<8x256xf32>
    %5 = vector.broadcast %1 : vector<1x256xf32> to vector<8x256xf32>
    %6 = arith.mulf %4, %5 : vector<8x256xf32>
    %7 = vector.broadcast %2 : vector<1x256xf32> to vector<8x256xf32>
    %8 = arith.addf %6, %7 : vector<8x256xf32>
    %9 = math.cos %8 : vector<8x256xf32>
    %10 = vector.broadcast %3 : vector<1x256xf32> to vector<8x256xf32>
    %11 = arith.mulf %9, %10 : vector<8x256xf32>
    %cst = arith.constant dense<0.000000e+00> : vector<8xf32>
    %12 = vector.multi_reduction <add>, %11, %cst [1] : vector<8x256xf32> to vector<8xf32>
    %13 = vector.shape_cast %12 : vector<8xf32> to vector<8x1xf32>
    %c0_5 = arith.constant 0 : index
    %c0_6 = arith.constant 0 : index
    %14 = vector.load %arg3[%c0_5, %c0_6] : memref<8x1xf32, #tpu.memory_space<vmem>>, vector<8x1xf32>
    tpu.vector_store %arg3[%c0_5, %c0_6], %13 {strides = array<i32>} : memref<8x1xf32, #tpu.memory_space<vmem>>, vector<8x1xf32>,
    return
  }
  func.func @transform_0(%arg0: i32) -> (i32, i32) {
    %c0_i32 = arith.constant 0 : i32
    %c0_i32_0 = arith.constant 0 : i32
    return %arg0, %c0_i32 : i32, i32
  }
  func.func @transform_1(%arg0: i32) -> (i32, i32) {
    %c0_i32 = arith.constant 0 : i32
    %c0_i32_0 = arith.constant 0 : i32
    %c0_i32_1 = arith.constant 0 : i32
    return %c0_i32, %c0_i32_0 : i32, i32
  }
  func.func @transform_2(%arg0: i32) -> (i32, i32) {
    %c0_i32 = arith.constant 0 : i32
    %c0_i32_0 = arith.constant 0 : i32
    return %arg0, %c0_i32 : i32, i32
  }
}

</mosaic_0001>

<llo_original>
// kernel: reweighting.1
$region0: #{reweighting.1}
  #allocation0 [shape = 'u32[]', space=smem, size = 0x4, offset = 0x4, fixed_abs, tag = 'smem constant byte address 0x4 - core index']
  #allocation1 [shape = 'u32[144,128]{1,0:T(1,128)}', space=vmem, size = 0x12000, scoped, tag = 'internal scratch']
  %s0 = inlined_call_operand.vmem [shape: f32[8,1], index: 0, kind: input, shape index: {}]
  %s1 = inlined_call_operand.vmem [shape: f32[3,256], index: 1, kind: input, shape index: {}]
  %s2 = inlined_call_operand.vmem [shape: f32[8,1], index: 2, kind: output, shape index: {}]
  %s3 = sld [smem:[#allocation0]]
  $region18: #{reweighting.1} parent=0
    _
  %s5 = ssub.s32 1, %s3
  %s6 = scalar_select 0, %s5, %s3
  // Predicated region
  $region2: #{reweighting.1} parent=0 // pred_check
    _
  $region3: #{reweighting.1} parent=0 // pred_check_branch
    %8 = sbr.rel (0) target = $region5
  $region4: #{reweighting.1} parent=0 // pred_region
    _
  $region5: #{reweighting.1} parent=0 // pred_fallthru
    _
  // Predicated region
  $region6: #{reweighting.1} parent=0 // pred_check
    _
  $region7: #{reweighting.1} parent=0 // pred_check_branch
    %10 = sbr.rel (0) target = $region9
  $region8: #{reweighting.1} parent=0 // pred_region
    _
  $region9: #{reweighting.1} parent=0 // pred_fallthru
    _
  %v11 = vld [vmem:[%s0] sm:$0xff]
  %v12 = vld [vmem:[%s1] ss:$4 sm:$0x3]
  %s13 = scalar_lea.vmem %s1, 1
  %v14 = vld [vmem:[%s13] ss:$4 sm:$0x3]
  %s15 = scalar_lea.vmem %s1, 2
  %v16 = vld [vmem:[%s15] ss:$4 sm:$0x3]
  %18 = vset.pattern.permute.xlu0 0
  %19 = vperm.xlu0 %18, %v11
  %v20 = vpop.permute.xlu0 %19
  %v23 = vlaneseq
  %v24 = vshrl.u32 %v23, 7
  %v25 = vsub.s32 0, %v24
  %v26 = vrot.slane %v12, %v25
  %v27 = vlaneseq
  %v28 = vshrl.u32 %v27, 7
  %v29 = vsub.s32 1, %v28
  %v30 = vrot.slane %v12, %v29
  %v33 = vmul.f32 %v20, %v26
  %v34 = vmul.f32 %v20, %v30
  %v36 = vlaneseq
  %v37 = vshrl.u32 %v36, 7
  %v38 = vsub.s32 0, %v37
  %v39 = vrot.slane %v14, %v38
  %v40 = vlaneseq
  %v41 = vshrl.u32 %v40, 7
  %v42 = vsub.s32 1, %v41
  %v43 = vrot.slane %v14, %v42
  %v46 = vadd.f32 %v33, %v39
  %v47 = vadd.f32 %v34, %v43
  %v48 = vand.u32 2147483647, %v46
  %vm49 = vcmp.le.f32.partialorder %v48, 0.7853982
  %vm50 = vcmp.lt.s32.totalorder %v46, 0
  %v51 = vand.u32 %v46, 2139095040
  %v52 = vshrl.u32 %v51, 23
  %v53 = vsub.s32 %v52, 127
  %v54 = vand.u32 2147483647, %v46
  %v55 = vand.u32 %v54, 8388607
  %v56 = vor.u32 %v55, 8388608
  %v57 = vsub.s32 0, %v56
  %v58 = vadd.s32 %v53, 1
  %vm59 = vcmp.gt.s32.totalorder %v58, 0
  %v60 = vsel %vm59, %v58, 0
  %v61 = vshrl.u32 %v60, 5
  %v62 = vand.u32 %v60, 31
  %v63 = vsub.s32 32, %v62
  %v64 = vshrl.u32 683565275, %v63
  %v65 = vshll.u32 683565275, %v62
  %v66 = vshrl.u32 2475754826, %v63
  %v67 = vor.u32 %v65, %v66
  %v68 = vshll.u32 2475754826, %v62
  %v69 = vshrl.u32 2131351028, %v63
  %v70 = vor.u32 %v68, %v69
  %v71 = vshll.u32 2131351028, %v62
  %v72 = vshrl.u32 2102212464, %v63
  %v73 = vor.u32 %v71, %v72
  %v74 = vshll.u32 2102212464, %v62
  %v75 = vshrl.u32 920167782, %v63
  %v76 = vor.u32 %v74, %v75
  %v77 = vshll.u32 920167782, %v62
  %v78 = vshrl.u32 1326507024, %v63
  %v79 = vor.u32 %v77, %v78
  %vm80 = vcmp.lt.s32.totalorder %v61, 1
  %vm81 = vcmp.lt.s32.totalorder %v61, 2
  %vm82 = vcmp.lt.s32.totalorder %v61, 3
  %vm83 = vcmp.lt.s32.totalorder %v61, 4
  %v84 = vsel %vm80, %v64, %v67
  %v85 = vsel %vm83, %v73, 2102212464
  %v86 = vsel %vm82, %v70, %v85
  %v87 = vsel %vm81, %v84, %v86
  %v88 = vsel %vm80, %v67, %v70
  %v89 = vsel %vm83, %v76, 920167782
  %v90 = vsel %vm82, %v73, %v89
  %v91 = vsel %vm81, %v88, %v90
  %v92 = vsel %vm80, %v70, %v73
  %v93 = vsel %vm83, %v79, 1326507024
  %v94 = vsel %vm82, %v76, %v93
  %v95 = vsel %vm81, %v92, %v94
  %v96 = vshll.u32 %v56, 8
  %v97 = vmul.u32.u64.compose %v96, %v95
  %v98 = vextract.low.u32 %v97
  %v99 = vextract.high.u32 %v97
  %v100 = vmul.u32.u64.compose %v96, %v91
  %v101 = vextract.low.u32 %v100
  %v102 = vextract.high.u32 %v100
  %v103 = vmul.u32 %v96, %v87
  %v104 = vadd.s32 %v99, %v101
  %vm105 = vc.u32 %v99, %v101
  %v106 = vadd.s32 %v102, 1
  %v107 = vsel %vm105, %v106, %v102
  %v108 = vadd.s32 %v103, %v107
  %v109 = vadd.s32 %v108, 536870912
  %v110 = vshrl.u32 %v109, 30
  %v111 = vshll.u32 %v110, 30
  %v112 = vsub.s32 %v108, %v111
  %vm113 = vcmp.lt.s32.totalorder %v112, 0
  %v114 = vsub.s32 0, %v112
  %v115 = vsel %vm113, %v114, %v112
  %v116 = vclz %v115
  %v117 = vsub.s32 %v116, 2
  %vm118 = vcmp.gt.s32.totalorder 0, %v117
  %v119 = vsel %vm118, 0, %v117
  %v120 = vsub.s32 32, %v119
  %v121 = vshll.u32 %v112, %v119
  %v122 = vshrl.u32 %v104, %v120
  %v123 = vor.u32 %v121, %v122
  %v124 = vsub.s32 4294967266, %v119
  %v125 = vadd.s32 %v124, 127
  %v126 = vshll.u32 %v125, 23
  %v127 = vor.u32 4788187, %v126
  %v128 = vand.u32 2147483647, %v127
  %v130 = vcvt.s32.f32 %v123
  %v131 = vmul.f32 %v130, %v128
  %v132 = vxor.u32 %v131, 2147483648
  %v133 = vsel %vm50, %v132, %v131
  %v134 = vsub.s32 4, %v110
  %v135 = vsel %vm50, %v134, %v110
  %v136 = vsel %vm49, %v46, %v133
  %v137 = vsel %vm49, 0, %v135
  %v138 = vcosq.f32.pop %v136
  %v139 = vsinq.f32.pop %v136
  %vm140 = vweird.f32 %v46
  %v141 = vand.u32 %v137, 3
  %vm142 = vcmp.lt.s32.totalorder %v141, 2
  %vm143 = vcmp.eq.s32.totalorder %v141, 0
  %v144 = vxor.u32 %v139, 2147483648
  %v145 = vsel %vm143, %v138, %v144
  %vm146 = vcmp.eq.s32.totalorder %v141, 2
  %v147 = vxor.u32 %v138, 2147483648
  %v148 = vsel %vm146, %v147, %v139
  %v149 = vsel %vm142, %v145, %v148
  %v150 = vsel %vm140, nan, %v149
  %v151 = vand.u32 2147483647, %v47
  %vm152 = vcmp.le.f32.partialorder %v151, 0.7853982
  %vm153 = vcmp.lt.s32.totalorder %v47, 0
  %v154 = vand.u32 %v47, 2139095040
  %v155 = vshrl.u32 %v154, 23
  %v156 = vsub.s32 %v155, 127
  %v157 = vand.u32 2147483647, %v47
  %v158 = vand.u32 %v157, 8388607
  %v159 = vor.u32 %v158, 8388608
  %v160 = vsub.s32 0, %v159
  %v161 = vadd.s32 %v156, 1
  %vm162 = vcmp.gt.s32.totalorder %v161, 0
  %v163 = vsel %vm162, %v161, 0
  %v164 = vshrl.u32 %v163, 5
  %v165 = vand.u32 %v163, 31
  %v166 = vsub.s32 32, %v165
  %v167 = vshrl.u32 683565275, %v166
  %v168 = vshll.u32 683565275, %v165
  %v169 = vshrl.u32 2475754826, %v166
  %v170 = vor.u32 %v168, %v169
  %v171 = vshll.u32 2475754826, %v165
  %v172 = vshrl.u32 2131351028, %v166
  %v173 = vor.u32 %v171, %v172
  %v174 = vshll.u32 2131351028, %v165
  %v175 = vshrl.u32 2102212464, %v166
  %v176 = vor.u32 %v174, %v175
  %v177 = vshll.u32 2102212464, %v165
  %v178 = vshrl.u32 920167782, %v166
  %v179 = vor.u32 %v177, %v178
  %v180 = vshll.u32 920167782, %v165
  %v181 = vshrl.u32 1326507024, %v166
  %v182 = vor.u32 %v180, %v181
  %vm183 = vcmp.lt.s32.totalorder %v164, 1
  %vm184 = vcmp.lt.s32.totalorder %v164, 2
  %vm185 = vcmp.lt.s32.totalorder %v164, 3
  %vm186 = vcmp.lt.s32.totalorder %v164, 4
  %v187 = vsel %vm183, %v167, %v170
  %v188 = vsel %vm186, %v176, 2102212464
  %v189 = vsel %vm185, %v173, %v188
  %v190 = vsel %vm184, %v187, %v189
  %v191 = vsel %vm183, %v170, %v173
  %v192 = vsel %vm186, %v179, 920167782
  %v193 = vsel %vm185, %v176, %v192
  %v194 = vsel %vm184, %v191, %v193
  %v195 = vsel %vm183, %v173, %v176
  %v196 = vsel %vm186, %v182, 1326507024
  %v197 = vsel %vm185, %v179, %v196
  %v198 = vsel %vm184, %v195, %v197
  %v199 = vshll.u32 %v159, 8
  %v200 = vmul.u32.u64.compose %v199, %v198
  %v201 = vextract.low.u32 %v200
  %v202 = vextract.high.u32 %v200
  %v203 = vmul.u32.u64.compose %v199, %v194
  %v204 = vextract.low.u32 %v203
  %v205 = vextract.high.u32 %v203
  %v206 = vmul.u32 %v199, %v190
  %v207 = vadd.s32 %v202, %v204
  %vm208 = vc.u32 %v202, %v204
  %v209 = vadd.s32 %v205, 1
  %v210 = vsel %vm208, %v209, %v205
  %v211 = vadd.s32 %v206, %v210
  %v212 = vadd.s32 %v211, 536870912
  %v213 = vshrl.u32 %v212, 30
  %v214 = vshll.u32 %v213, 30
  %v215 = vsub.s32 %v211, %v214
  %vm216 = vcmp.lt.s32.totalorder %v215, 0
  %v217 = vsub.s32 0, %v215
  %v218 = vsel %vm216, %v217, %v215
  %v219 = vclz %v218
  %v220 = vsub.s32 %v219, 2
  %vm221 = vcmp.gt.s32.totalorder 0, %v220
  %v222 = vsel %vm221, 0, %v220
  %v223 = vsub.s32 32, %v222
  %v224 = vshll.u32 %v215, %v222
  %v225 = vshrl.u32 %v207, %v223
  %v226 = vor.u32 %v224, %v225
  %v227 = vsub.s32 4294967266, %v222
  %v228 = vadd.s32 %v227, 127
  %v229 = vshll.u32 %v228, 23
  %v230 = vor.u32 4788187, %v229
  %v231 = vand.u32 2147483647, %v230
  %v233 = vcvt.s32.f32 %v226
  %v234 = vmul.f32 %v233, %v231
  %v235 = vxor.u32 %v234, 2147483648
  %v236 = vsel %vm153, %v235, %v234
  %v237 = vsub.s32 4, %v213
  %v238 = vsel %vm153, %v237, %v213
  %v239 = vsel %vm152, %v47, %v236
  %v240 = vsel %vm152, 0, %v238
  %v241 = vcosq.f32.pop %v239
  %v242 = vsinq.f32.pop %v239
  %vm243 = vweird.f32 %v47
  %v244 = vand.u32 %v240, 3
  %vm245 = vcmp.lt.s32.totalorder %v244, 2
  %vm246 = vcmp.eq.s32.totalorder %v244, 0
  %v247 = vxor.u32 %v242, 2147483648
  %v248 = vsel %vm246, %v241, %v247
  %vm249 = vcmp.eq.s32.totalorder %v244, 2
  %v250 = vxor.u32 %v241, 2147483648
  %v251 = vsel %vm249, %v250, %v242
  %v252 = vsel %vm245, %v248, %v251
  %v253 = vsel %vm243, nan, %v252
  %v255 = vlaneseq
  %v256 = vshrl.u32 %v255, 7
  %v257 = vsub.s32 0, %v256
  %v258 = vrot.slane %v16, %v257
  %v259 = vlaneseq
  %v260 = vshrl.u32 %v259, 7
  %v261 = vsub.s32 1, %v260
  %v262 = vrot.slane %v16, %v261
  %v265 = vmul.f32 %v150, %v258
  %v266 = vmul.f32 %v253, %v262
  %v267 = vadd.f32 %v265, %v266
  %268 = vadd.xlane.f32.xlu0 %v267
  %v269 = vpop.xlane.xlu0 %268
  %vm270 = vcmask 7168
  %271 = vst.msk [vmem:[%s2] sm:$0xff] %vm270, %v269
  // Predicated region
  $region10: #{reweighting.1} parent=0 // pred_check
    _
  $region11: #{reweighting.1} parent=0 // pred_check_branch
    %273 = sbr.rel (0) target = $region13
  $region12: #{reweighting.1} parent=0 // pred_region
    _
  $region13: #{reweighting.1} parent=0 // pred_fallthru
    _
  // Predicated region
  $region14: #{reweighting.1} parent=0 // pred_check
    _
  $region15: #{reweighting.1} parent=0 // pred_check_branch
    %275 = sbr.rel (0) target = $region17
  $region16: #{reweighting.1} parent=0 // pred_region
    _
  $region17: #{reweighting.1} parent=0 // pred_fallthru
    _

</llo_original>
